<compile_context>
chip_gen: v7x
topology: tpu7x:2x2x1
jax: 0.10.0
libtpu: 0.0.40
codegen_flags: <defaults>
</compile_context>

<pallas_src>
import math

import jax
import jax.numpy as jnp
import numpy as np
from jax.experimental import pallas as pl
from jax.experimental.pallas import tpu as pltpu

FEATURE_NUM = 12
EMB = 10

# Row indices inside the packed (16, 128) constants table.
(R_EMB_W, R_EMB_B, R_UV, R_CV, R_ATT_SC, R_FC1_B, R_FC2_B, R_FC3_B,
 R_FC4_B, R_FC5_W, R_FC5_B, R_FC6_B, R_FC7_W, R_FC7_B, R_BN_G, R_BN_B) = range(16)
CONST_ROWS = 16
CONST_LANES = 128

# Row offsets inside the packed (SLAB_ROWS, 128) weight slab (8-aligned rows).
OFF_FC1 = 0      # (10, 100)
OFF_FC2 = 16     # (100, 50)
OFF_FC3 = 120    # (50, 10)
OFF_FC4 = 176    # (10, 50)
OFF_FC6 = 192    # (12, 50)
SLAB_ROWS = 208


# ----------------------------- kernel helpers -----------------------------

def _bn3(y, g, b, eps=1e-5):
    """Train-mode BatchNorm1d on (B, C, L): per-channel stats over (batch, L).

    g, b are pre-broadcast to (1, C, L).
    """
    mean = jnp.mean(y, axis=(0, 2), keepdims=True)
    var = jnp.mean((y - mean) ** 2, axis=(0, 2), keepdims=True)
    return (y - mean) * jax.lax.rsqrt(var + eps) * g + b


# -------------------------------- kernel ----------------------------------

def encoder_kernel(x_ref, consts_ref, w_ref, out_ref):
    B, S = x_ref.shape
    D = EMB
    N = B * S
    c = consts_ref

    emb_w = c[R_EMB_W:R_EMB_W + 1, :D].reshape(1, 1, D)
    emb_b = c[R_EMB_B:R_EMB_B + 1, :D].reshape(1, 1, D)
    u_v = c[R_UV:R_UV + 1, :D].reshape(1, 1, D)
    c_v = c[R_CV:R_CV + 1, :D].reshape(1, 1, D)
    a_s = c[R_ATT_SC:R_ATT_SC + 1, 0:1]                 # (1,1) folded scalars
    b_s = c[R_ATT_SC:R_ATT_SC + 1, 1:2]
    cc_s = c[R_ATT_SC:R_ATT_SC + 1, 2:3]
    d_s = c[R_ATT_SC:R_ATT_SC + 1, 3:4]
    fc1_b = c[R_FC1_B:R_FC1_B + 1, :100]
    fc2_b = c[R_FC2_B:R_FC2_B + 1, :50]
    fc3_b = c[R_FC3_B:R_FC3_B + 1, :D]
    fc4_b = c[R_FC4_B:R_FC4_B + 1, :50]
    fc5_w = c[R_FC5_W:R_FC5_W + 1, :50].reshape(1, 1, 50)
    fc5_b = c[R_FC5_B:R_FC5_B + 1, 0:1]
    fc6_b = c[R_FC6_B:R_FC6_B + 1, :50]
    fc7_w = c[R_FC7_W:R_FC7_W + 1, :50]
    fc7_b = c[R_FC7_B:R_FC7_B + 1, 0:1]

    # Hoisted (1,S,1)->(1,S,D) broadcast, reused by both BatchNorm calls.
    bn_g = jnp.broadcast_to(c[R_BN_G:R_BN_G + 1, :S].reshape(1, S, 1), (1, S, D))
    bn_b = jnp.broadcast_to(c[R_BN_B:R_BN_B + 1, :S].reshape(1, S, 1), (1, S, D))

    # Weight slab slices (static, 8-aligned row offsets).
    fc1_w = w_ref[OFF_FC1:OFF_FC1 + D, :100]
    fc2_w = w_ref[OFF_FC2:OFF_FC2 + 100, :50]
    fc3_w = w_ref[OFF_FC3:OFF_FC3 + 50, :D]
    fc4_w = w_ref[OFF_FC4:OFF_FC4 + D, :50]
    fc6_w = w_ref[OFF_FC6:OFF_FC6 + S, :50]

    x = x_ref[...]                                      # (B, S)
    x3 = x.reshape(B, S, 1)

    # Embedding Linear(1,10): rank-1 affine in x -> pure VPU broadcast.
    emb3 = x3 * emb_w + emb_b                           # (B, S, D)

    # Attention, algebraically folded (no MXU work at all):
    #   scores[b,i,j] = x[b,i]*g1[b,j] + g0[b,j]
    g1 = (a_s * x + b_s).reshape(B, 1, S)
    g0 = (cc_s * x + d_s).reshape(B, 1, S)
    scores = x3 * g1 + g0                               # (B, S, S)

    # legacy nn.Softmax() on a 3-D tensor => dim=0 (batch axis).
    m = jnp.max(scores, axis=0, keepdims=True)
    e = jnp.exp(scores - m)
    p = e / jnp.sum(e, axis=0, keepdims=True)           # exact divide (tiny tensor)

    s0 = jnp.sum(p, axis=2)                             # (B, S)  sum_j p
    s1 = jnp.sum(p * x.reshape(B, 1, S), axis=2)        # (B, S)  sum_j p*x_j
    att3 = s1.reshape(B, S, 1) * u_v + s0.reshape(B, S, 1) * c_v   # (B, S, D)
    # dropout == identity (inference)

    bn1 = _bn3(emb3 + att3, bn_g, bn_b)                 # (B, S, D)

    # Per-token MLP on the 2-D token-major activation.
    a2 = bn1.reshape(N, D)
    h = jnp.maximum(jnp.dot(a2, fc1_w,
                            preferred_element_type=jnp.float32) + fc1_b, 0.0)   # (N,100)
    h = jnp.maximum(jnp.dot(h, fc2_w,
                            preferred_element_type=jnp.float32) + fc2_b, 0.0)   # (N,50)
    h = jnp.dot(h, fc3_w, preferred_element_type=jnp.float32) + fc3_b           # (N,10)

    bn2 = _bn3(bn1 + h.reshape(B, S, D), bn_g, bn_b)    # (B, S, D)

    # Tail: fc4 token-major; fc5 (Dout=1) as VPU broadcast-multiply + lane reduce;
    # fc6 matmul; fc7 computed transposed so the kernel output (1, B) is lane-dense.
    h4 = jnp.maximum(jnp.dot(bn2.reshape(N, D), fc4_w,
                             preferred_element_type=jnp.float32) + fc4_b, 0.0)  # (N,50)
    tm = jnp.sum(h4.reshape(B, S, 50) * fc5_w, axis=2) + fc5_b                  # (B, S)
    h6 = jnp.maximum(jnp.dot(tm, fc6_w,
                             preferred_element_type=jnp.float32) + fc6_b, 0.0)  # (B,50)
    out_ref[...] = (jnp.einsum('oj,bj->ob', fc7_w, h6,
                               preferred_element_type=jnp.float32) + fc7_b)     # (1, B)


# --------------------------- parameter packing ------------------------------

def pack_params(params):
    """Pack the 24 raw params into 2 kernel inputs: a consts table and a weight slab."""
    (emb_w, emb_b, w1_w, w1_b, w2_w, w2_b, w3_w, w3_b,
     fc1_w, fc1_b, fc2_w, fc2_b, fc3_w, fc3_b,
     bn_g, bn_b, fc4_w, fc4_b, fc5_w, fc5_b,
     fc6_w, fc6_b, fc7_w, fc7_b) = [jnp.asarray(p, jnp.float32) for p in params]

    emb_w_v = emb_w.reshape(-1)                          # (10,)
    emb_b_v = emb_b.reshape(-1)                          # (10,)

    # Fold embedding into the q/k/v projections:  q = x*u_q + c_q  etc.
    wqkv = jnp.concatenate([w1_w, w2_w, w3_w], axis=1)   # (10, 30)
    bqkv = jnp.concatenate([w1_b, w2_b, w3_b], axis=1).reshape(-1)  # (30,)
    u = emb_w_v @ wqkv                                   # (30,)
    c0 = emb_b_v @ wqkv + bqkv                           # (30,)
    u_q, u_k, u_v = u[:EMB], u[EMB:2 * EMB], u[2 * EMB:]
    c_q, c_k, c_v = c0[:EMB], c0[EMB:2 * EMB], c0[2 * EMB:]

    # scores[b,i,j] = a*x_i*x_j + b*x_i + c*x_j + d
    att_sc = jnp.stack([jnp.dot(u_q, u_k), jnp.dot(u_q, c_k),
                        jnp.dot(c_q, u_k), jnp.dot(c_q, c_k)])      # (4,)

    def row(vec):
        v = jnp.reshape(vec, (-1,)).astype(jnp.float32)
        return jnp.pad(v, (0, CONST_LANES - v.shape[0]))

    rows = [None] * CONST_ROWS
    rows[R_EMB_W] = row(emb_w_v)
    rows[R_EMB_B] = row(emb_b_v)
    rows[R_UV] = row(u_v)
    rows[R_CV] = row(c_v)
    rows[R_ATT_SC] = row(att_sc)
    rows[R_FC1_B] = row(fc1_b)
    rows[R_FC2_B] = row(fc2_b)
    rows[R_FC3_B] = row(fc3_b)
    rows[R_FC4_B] = row(fc4_b)
    rows[R_FC5_W] = row(fc5_w)       # (50,1) -> fc5_w^T row
    rows[R_FC5_B] = row(fc5_b)
    rows[R_FC6_B] = row(fc6_b)
    rows[R_FC7_W] = row(fc7_w)       # (50,1) -> fc7_w^T row
    rows[R_FC7_B] = row(fc7_b)
    rows[R_BN_G] = row(bn_g)
    rows[R_BN_B] = row(bn_b)
    consts = jnp.stack(rows, axis=0)                     # (16, 128)

    def place(slab, w, row_off):
        r, cdim = w.shape
        return slab.at[row_off:row_off + r, :cdim].set(w)

    slab = jnp.zeros((SLAB_ROWS, CONST_LANES), jnp.float32)
    slab = place(slab, fc1_w, OFF_FC1)
    slab = place(slab, fc2_w, OFF_FC2)
    slab = place(slab, fc3_w, OFF_FC3)
    slab = place(slab, fc4_w, OFF_FC4)
    slab = place(slab, fc6_w, OFF_FC6)

    return consts, slab


# ------------------------------- wrapper -----------------------------------

def encoder_forward(x, params):
    """x: (B, FEATURE_NUM, 1) float32 (PyTorch layout). Returns (B, 1) float32."""
    B = x.shape[0]
    x2 = jnp.asarray(x, jnp.float32).reshape(B, FEATURE_NUM)    # lane-dense input
    consts, slab = pack_params(params)
    out_t = pl.pallas_call(
        encoder_kernel,
        out_shape=jax.ShapeDtypeStruct((1, B), jnp.float32),    # lane-dense in B
        in_specs=[pl.BlockSpec(memory_space=pltpu.MemorySpace.VMEM)] * 3,
        out_specs=pl.BlockSpec(memory_space=pltpu.MemorySpace.VMEM),
        # No vmem_limit_bytes override: the kernel needs <1 MiB; the default scoped
        # VMEM limit is ample on v5e/v6e/v7x and leaves compiler headroom on v7x.
    )(x2, consts, slab)
    return out_t.reshape(B, 1)


# --------------------------- parameter setup --------------------------------

def make_params(key):
    def lin(k, fan_in, fan_out):
        kw, kb = jax.random.split(k)
        bound = 1.0 / math.sqrt(fan_in)
        w = jax.random.uniform(kw, (fan_in, fan_out), jnp.float32, -bound, bound)
        b = jax.random.uniform(kb, (1, fan_out), jnp.float32, -bound, bound)
        return [w, b]

    keys = jax.random.split(key, 11)
    params = []
    params += lin(keys[0], 1, EMB)            # embedding
    params += lin(keys[1], EMB, EMB)          # w1
    params += lin(keys[2], EMB, EMB)          # w2
    params += lin(keys[3], EMB, EMB)          # w3
    params += lin(keys[4], EMB, 100)          # fc1
    params += lin(keys[5], 100, 50)           # fc2
    params += lin(keys[6], 50, EMB)           # fc3
    params += [jnp.ones((1, FEATURE_NUM), jnp.float32),   # batchnorm gamma
               jnp.zeros((1, FEATURE_NUM), jnp.float32)]  # batchnorm beta
    params += lin(keys[7], EMB, 50)           # fc4
    params += lin(keys[8], 50, 1)             # fc5
    params += lin(keys[9], FEATURE_NUM, 50)   # fc6
    params += lin(keys[10], 50, 1)            # fc7
    return params


# ----------------------------- pure-JAX ref ---------------------------------

def reference_forward(x, params):
    (emb_w, emb_b, w1_w, w1_b, w2_w, w2_b, w3_w, w3_b,
     fc1_w, fc1_b, fc2_w, fc2_b, fc3_w, fc3_b,
     bn_g, bn_b, fc4_w, fc4_b, fc5_w, fc5_b,
     fc6_w, fc6_b, fc7_w, fc7_b) = params

    def lin(a, w, b):
        return jnp.einsum('...i,io->...o', a, w) + b.reshape(-1)

    def bn(a, g, b, eps=1e-5):
        mean = jnp.mean(a, axis=(0, 2), keepdims=True)
        var = jnp.mean((a - mean) ** 2, axis=(0, 2), keepdims=True)
        return ((a - mean) / jnp.sqrt(var + eps)
                * g.reshape(1, -1, 1) + b.reshape(1, -1, 1))

    emb = lin(x, emb_w, emb_b)
    q, k, v = lin(emb, w1_w, w1_b), lin(emb, w2_w, w2_b), lin(emb, w3_w, w3_b)
    scores = jnp.einsum('bqd,bkd->bqk', q, k)
    p = jax.nn.softmax(scores, axis=0)          # legacy dim=0 softmax
    att = jnp.einsum('bqk,bkd->bqd', p, v)
    att = bn(emb + att, bn_g, bn_b)
    enc = jax.nn.relu(lin(att, fc1_w, fc1_b))
    enc = jax.nn.relu(lin(enc, fc2_w, fc2_b))
    enc = lin(enc, fc3_w, fc3_b)
    enc = bn(att + enc, bn_g, bn_b)
    tm = jax.nn.relu(lin(enc, fc4_w, fc4_b))
    tm = lin(tm, fc5_w, fc5_b)[..., 0]
    tm = jax.nn.relu(tm @ fc6_w + fc6_b.reshape(-1))
    tm = tm @ fc7_w + fc7_b.reshape(-1)
    return tm


# --------------------------------- main -------------------------------------

if __name__ == "__main__":
    key = jax.random.PRNGKey(0)
    kx, kp = jax.random.split(key)
    B = 2
    x = jax.random.normal(kx, (B, FEATURE_NUM, 1), jnp.float32)
    params = make_params(kp)

    out = encoder_forward(x, params)
    out = jax.block_until_ready(out)
    assert out.shape == (B, 1)

    ref = reference_forward(x, params)
    # Tolerance covers the algebraically-folded (embedding+qkv+attention) parameter
    # products and the different f32 accumulation orders vs. the plain-JAX reference.
    np.testing.assert_allclose(np.asarray(out), np.asarray(ref),
                               rtol=1e-3, atol=1e-3)
    print("KERNEL_OK")
</pallas_src>

<mosaic_0001>
module attributes {stable_mosaic.version = 11 : i64} {
  func.func @encoder_kernel(%arg0: memref<2x12xf32, #tpu.memory_space<vmem>>, %arg1: memref<16x128xf32, #tpu.memory_space<vmem>>, %arg2: memref<208x128xf32, #tpu.memory_space<vmem>>, %arg3: memref<1x2xf32, #tpu.memory_space<vmem>>) attributes {dimension_semantics = [], scalar_prefetch = 0 : i64, scratch_operands = 0 : i64, tpu.core_type = #tpu.core_type<tc>} {
    %c0 = arith.constant 0 : index
    %c0_0 = arith.constant 0 : index
    %0 = vector.load %arg1[%c0, %c0_0] : memref<16x128xf32, #tpu.memory_space<vmem>>, vector<1x10xf32>
    %1 = vector.shape_cast %0 : vector<1x10xf32> to vector<1x1x10xf32>
    %c1 = arith.constant 1 : index
    %c0_1 = arith.constant 0 : index
    %2 = vector.load %arg1[%c1, %c0_1] : memref<16x128xf32, #tpu.memory_space<vmem>>, vector<1x10xf32>
    %3 = vector.shape_cast %2 : vector<1x10xf32> to vector<1x1x10xf32>
    %c2 = arith.constant 2 : index
    %c0_2 = arith.constant 0 : index
    %4 = vector.load %arg1[%c2, %c0_2] : memref<16x128xf32, #tpu.memory_space<vmem>>, vector<1x10xf32>
    %5 = vector.shape_cast %4 : vector<1x10xf32> to vector<1x1x10xf32>
    %c3 = arith.constant 3 : index
    %c0_3 = arith.constant 0 : index
    %6 = vector.load %arg1[%c3, %c0_3] : memref<16x128xf32, #tpu.memory_space<vmem>>, vector<1x10xf32>
    %7 = vector.shape_cast %6 : vector<1x10xf32> to vector<1x1x10xf32>
    %c4 = arith.constant 4 : index
    %c0_4 = arith.constant 0 : index
    %8 = vector.load %arg1[%c4, %c0_4] : memref<16x128xf32, #tpu.memory_space<vmem>>, vector<1x1xf32>
    %c4_5 = arith.constant 4 : index
    %c1_6 = arith.constant 1 : index
    %9 = vector.load %arg1[%c4_5, %c1_6] : memref<16x128xf32, #tpu.memory_space<vmem>>, vector<1x1xf32>
    %c4_7 = arith.constant 4 : index
    %c2_8 = arith.constant 2 : index
    %10 = vector.load %arg1[%c4_7, %c2_8] : memref<16x128xf32, #tpu.memory_space<vmem>>, vector<1x1xf32>
    %c4_9 = arith.constant 4 : index
    %c3_10 = arith.constant 3 : index
    %11 = vector.load %arg1[%c4_9, %c3_10] : memref<16x128xf32, #tpu.memory_space<vmem>>, vector<1x1xf32>
    %c5 = arith.constant 5 : index
    %c0_11 = arith.constant 0 : index
    %12 = vector.load %arg1[%c5, %c0_11] : memref<16x128xf32, #tpu.memory_space<vmem>>, vector<1x100xf32>
    %c6 = arith.constant 6 : index
    %c0_12 = arith.constant 0 : index
    %13 = vector.load %arg1[%c6, %c0_12] : memref<16x128xf32, #tpu.memory_space<vmem>>, vector<1x50xf32>
    %c7 = arith.constant 7 : index
    %c0_13 = arith.constant 0 : index
    %14 = vector.load %arg1[%c7, %c0_13] : memref<16x128xf32, #tpu.memory_space<vmem>>, vector<1x10xf32>
    %c8 = arith.constant 8 : index
    %c0_14 = arith.constant 0 : index
    %15 = vector.load %arg1[%c8, %c0_14] : memref<16x128xf32, #tpu.memory_space<vmem>>, vector<1x50xf32>
    %c9 = arith.constant 9 : index
    %c0_15 = arith.constant 0 : index
    %16 = vector.load %arg1[%c9, %c0_15] : memref<16x128xf32, #tpu.memory_space<vmem>>, vector<1x50xf32>
    %17 = vector.shape_cast %16 : vector<1x50xf32> to vector<1x1x50xf32>
    %c10 = arith.constant 10 : index
    %c0_16 = arith.constant 0 : index
    %18 = vector.load %arg1[%c10, %c0_16] : memref<16x128xf32, #tpu.memory_space<vmem>>, vector<1x1xf32>
    %c11 = arith.constant 11 : index
    %c0_17 = arith.constant 0 : index
    %19 = vector.load %arg1[%c11, %c0_17] : memref<16x128xf32, #tpu.memory_space<vmem>>, vector<1x50xf32>
    %c12 = arith.constant 12 : index
    %c0_18 = arith.constant 0 : index
    %20 = vector.load %arg1[%c12, %c0_18] : memref<16x128xf32, #tpu.memory_space<vmem>>, vector<1x50xf32>
    %c13 = arith.constant 13 : index
    %c0_19 = arith.constant 0 : index
    %21 = vector.load %arg1[%c13, %c0_19] : memref<16x128xf32, #tpu.memory_space<vmem>>, vector<1x1xf32>
    %c14 = arith.constant 14 : index
    %c0_20 = arith.constant 0 : index
    %22 = vector.load %arg1[%c14, %c0_20] : memref<16x128xf32, #tpu.memory_space<vmem>>, vector<1x12xf32>
    %23 = vector.shape_cast %22 : vector<1x12xf32> to vector<1x12x1xf32>
    %24 = vector.shape_cast %23 : vector<1x12x1xf32> to vector<1x12x1xf32>
    %25 = vector.broadcast %24 : vector<1x12x1xf32> to vector<1x12x10xf32>
    %c15 = arith.constant 15 : index
    %c0_21 = arith.constant 0 : index
    %26 = vector.load %arg1[%c15, %c0_21] : memref<16x128xf32, #tpu.memory_space<vmem>>, vector<1x12xf32>
    %27 = vector.shape_cast %26 : vector<1x12xf32> to vector<1x12x1xf32>
    %28 = vector.shape_cast %27 : vector<1x12x1xf32> to vector<1x12x1xf32>
    %29 = vector.broadcast %28 : vector<1x12x1xf32> to vector<1x12x10xf32>
    %c0_22 = arith.constant 0 : index
    %c0_23 = arith.constant 0 : index
    %30 = vector.load %arg2[%c0_22, %c0_23] : memref<208x128xf32, #tpu.memory_space<vmem>>, vector<10x100xf32>
    %c16 = arith.constant 16 : index
    %c0_24 = arith.constant 0 : index
    %31 = vector.load %arg2[%c16, %c0_24] : memref<208x128xf32, #tpu.memory_space<vmem>>, vector<100x50xf32>
    %c120 = arith.constant 120 : index
    %c0_25 = arith.constant 0 : index
    %32 = vector.load %arg2[%c120, %c0_25] : memref<208x128xf32, #tpu.memory_space<vmem>>, vector<50x10xf32>
    %c176 = arith.constant 176 : index
    %c0_26 = arith.constant 0 : index
    %33 = vector.load %arg2[%c176, %c0_26] : memref<208x128xf32, #tpu.memory_space<vmem>>, vector<10x50xf32>
    %c192 = arith.constant 192 : index
    %c0_27 = arith.constant 0 : index
    %34 = vector.load %arg2[%c192, %c0_27] : memref<208x128xf32, #tpu.memory_space<vmem>>, vector<12x50xf32>
    %c0_28 = arith.constant 0 : index
    %c0_29 = arith.constant 0 : index
    %35 = vector.load %arg0[%c0_28, %c0_29] : memref<2x12xf32, #tpu.memory_space<vmem>>, vector<2x12xf32>
    %36 = vector.shape_cast %35 : vector<2x12xf32> to vector<2x12x1xf32>
    %37 = vector.broadcast %36 : vector<2x12x1xf32> to vector<2x12x10xf32>
    %38 = vector.broadcast %1 : vector<1x1x10xf32> to vector<2x12x10xf32>
    %39 = arith.mulf %37, %38 : vector<2x12x10xf32>
    %40 = vector.broadcast %3 : vector<1x1x10xf32> to vector<2x12x10xf32>
    %41 = arith.addf %39, %40 : vector<2x12x10xf32>
    %42 = vector.broadcast %8 : vector<1x1xf32> to vector<2x12xf32>
    %43 = arith.mulf %42, %35 : vector<2x12xf32>
    %44 = vector.broadcast %9 : vector<1x1xf32> to vector<2x12xf32>
    %45 = arith.addf %43, %44 : vector<2x12xf32>
    %46 = vector.shape_cast %45 : vector<2x12xf32> to vector<2x1x12xf32>
    %47 = vector.broadcast %10 : vector<1x1xf32> to vector<2x12xf32>
    %48 = arith.mulf %47, %35 : vector<2x12xf32>
    %49 = vector.broadcast %11 : vector<1x1xf32> to vector<2x12xf32>
    %50 = arith.addf %48, %49 : vector<2x12xf32>
    %51 = vector.shape_cast %50 : vector<2x12xf32> to vector<2x1x12xf32>
    %52 = vector.broadcast %36 : vector<2x12x1xf32> to vector<2x12x12xf32>
    %53 = vector.broadcast %46 : vector<2x1x12xf32> to vector<2x12x12xf32>
    %54 = arith.mulf %52, %53 : vector<2x12x12xf32>
    %55 = vector.broadcast %51 : vector<2x1x12xf32> to vector<2x12x12xf32>
    %56 = arith.addf %54, %55 : vector<2x12x12xf32>
    %cst = arith.constant dense<0xFF800000> : vector<12x12xf32>
    %57 = vector.multi_reduction <maximumf>, %56, %cst [0] : vector<2x12x12xf32> to vector<12x12xf32>
    %58 = vector.shape_cast %57 : vector<12x12xf32> to vector<1x12x12xf32>
    %59 = vector.broadcast %58 : vector<1x12x12xf32> to vector<2x12x12xf32>
    %60 = arith.subf %56, %59 : vector<2x12x12xf32>
    %61 = math.exp %60 : vector<2x12x12xf32>
    %cst_30 = arith.constant dense<0.000000e+00> : vector<12x12xf32>
    %62 = vector.multi_reduction <add>, %61, %cst_30 [0] : vector<2x12x12xf32> to vector<12x12xf32>
    %63 = vector.shape_cast %62 : vector<12x12xf32> to vector<1x12x12xf32>
    %64 = vector.broadcast %63 : vector<1x12x12xf32> to vector<2x12x12xf32>
    %65 = arith.divf %61, %64 : vector<2x12x12xf32>
    %cst_31 = arith.constant dense<0.000000e+00> : vector<2x12xf32>
    %66 = vector.multi_reduction <add>, %65, %cst_31 [2] : vector<2x12x12xf32> to vector<2x12xf32>
    %67 = vector.shape_cast %35 : vector<2x12xf32> to vector<2x1x12xf32>
    %68 = vector.broadcast %67 : vector<2x1x12xf32> to vector<2x12x12xf32>
    %69 = arith.mulf %65, %68 : vector<2x12x12xf32>
    %cst_32 = arith.constant dense<0.000000e+00> : vector<2x12xf32>
    %70 = vector.multi_reduction <add>, %69, %cst_32 [2] : vector<2x12x12xf32> to vector<2x12xf32>
    %71 = vector.shape_cast %70 : vector<2x12xf32> to vector<2x12x1xf32>
    %72 = vector.broadcast %71 : vector<2x12x1xf32> to vector<2x12x10xf32>
    %73 = vector.broadcast %5 : vector<1x1x10xf32> to vector<2x12x10xf32>
    %74 = arith.mulf %72, %73 : vector<2x12x10xf32>
    %75 = vector.shape_cast %66 : vector<2x12xf32> to vector<2x12x1xf32>
    %76 = vector.broadcast %75 : vector<2x12x1xf32> to vector<2x12x10xf32>
    %77 = vector.broadcast %7 : vector<1x1x10xf32> to vector<2x12x10xf32>
    %78 = arith.mulf %76, %77 : vector<2x12x10xf32>
    %79 = arith.addf %74, %78 : vector<2x12x10xf32>
    %80 = arith.addf %41, %79 : vector<2x12x10xf32>
    %cst_33 = arith.constant dense<0.000000e+00> : vector<12xf32>
    %81 = vector.multi_reduction <add>, %80, %cst_33 [0, 2] : vector<2x12x10xf32> to vector<12xf32>
    %82 = vector.shape_cast %81 : vector<12xf32> to vector<1x12x1xf32>
    %cst_34 = arith.constant 2.000000e+01 : f32
    %83 = vector.broadcast %cst_34 : f32 to vector<1x12x1xf32>
    %84 = arith.divf %82, %83 : vector<1x12x1xf32>
    %85 = vector.broadcast %84 : vector<1x12x1xf32> to vector<2x12x10xf32>
    %86 = arith.subf %80, %85 : vector<2x12x10xf32>
    %87 = arith.mulf %86, %86 : vector<2x12x10xf32>
    %cst_35 = arith.constant dense<0.000000e+00> : vector<12xf32>
    %88 = vector.multi_reduction <add>, %87, %cst_35 [0, 2] : vector<2x12x10xf32> to vector<12xf32>
    %89 = vector.shape_cast %88 : vector<12xf32> to vector<1x12x1xf32>
    %cst_36 = arith.constant 2.000000e+01 : f32
    %90 = vector.broadcast %cst_36 : f32 to vector<1x12x1xf32>
    %91 = arith.divf %89, %90 : vector<1x12x1xf32>
    %92 = vector.broadcast %84 : vector<1x12x1xf32> to vector<2x12x10xf32>
    %93 = arith.subf %80, %92 : vector<2x12x10xf32>
    %cst_37 = arith.constant 9.99999974E-6 : f32
    %94 = vector.broadcast %cst_37 : f32 to vector<1x12x1xf32>
    %95 = arith.addf %91, %94 : vector<1x12x1xf32>
    %96 = math.rsqrt %95 : vector<1x12x1xf32>
    %97 = vector.broadcast %96 : vector<1x12x1xf32> to vector<2x12x10xf32>
    %98 = arith.mulf %93, %97 : vector<2x12x10xf32>
    %99 = vector.broadcast %25 : vector<1x12x10xf32> to vector<2x12x10xf32>
    %100 = arith.mulf %98, %99 : vector<2x12x10xf32>
    %101 = vector.broadcast %29 : vector<1x12x10xf32> to vector<2x12x10xf32>
    %102 = arith.addf %100, %101 : vector<2x12x10xf32>
    %103 = vector.shape_cast %102 : vector<2x12x10xf32> to vector<24x10xf32>
    %cst_38 = arith.constant dense<0.000000e+00> : vector<24x100xf32>
    %104 = tpu.matmul %103, %30, %cst_38 {dimension_numbers = #tpu.dot_dimension_numbers<[1], [0], [0], [1], [0, 0, 1, 1], [], []>} : vector<24x10xf32>, vector<10x100xf32>, vector<24x100xf32> -> vector<24x100xf32>
    %105 = vector.broadcast %12 : vector<1x100xf32> to vector<24x100xf32>
    %106 = arith.addf %104, %105 : vector<24x100xf32>
    %cst_39 = arith.constant 0.000000e+00 : f32
    %107 = vector.broadcast %cst_39 : f32 to vector<24x100xf32>
    %108 = arith.maximumf %106, %107 : vector<24x100xf32>
    %cst_40 = arith.constant dense<0.000000e+00> : vector<24x50xf32>
    %109 = tpu.matmul %108, %31, %cst_40 {dimension_numbers = #tpu.dot_dimension_numbers<[1], [0], [0], [1], [0, 0, 1, 1], [], []>} : vector<24x100xf32>, vector<100x50xf32>, vector<24x50xf32> -> vector<24x50xf32>
    %110 = vector.broadcast %13 : vector<1x50xf32> to vector<24x50xf32>
    %111 = arith.addf %109, %110 : vector<24x50xf32>
    %cst_41 = arith.constant 0.000000e+00 : f32
    %112 = vector.broadcast %cst_41 : f32 to vector<24x50xf32>
    %113 = arith.maximumf %111, %112 : vector<24x50xf32>
    %cst_42 = arith.constant dense<0.000000e+00> : vector<24x10xf32>
    %114 = tpu.matmul %113, %32, %cst_42 {dimension_numbers = #tpu.dot_dimension_numbers<[1], [0], [0], [1], [0, 0, 1, 1], [], []>} : vector<24x50xf32>, vector<50x10xf32>, vector<24x10xf32> -> vector<24x10xf32>
    %115 = vector.broadcast %14 : vector<1x10xf32> to vector<24x10xf32>
    %116 = arith.addf %114, %115 : vector<24x10xf32>
    %117 = vector.shape_cast %116 : vector<24x10xf32> to vector<2x12x10xf32>
    %118 = arith.addf %102, %117 : vector<2x12x10xf32>
    %cst_43 = arith.constant dense<0.000000e+00> : vector<12xf32>
    %119 = vector.multi_reduction <add>, %118, %cst_43 [0, 2] : vector<2x12x10xf32> to vector<12xf32>
    %120 = vector.shape_cast %119 : vector<12xf32> to vector<1x12x1xf32>
    %cst_44 = arith.constant 2.000000e+01 : f32
    %121 = vector.broadcast %cst_44 : f32 to vector<1x12x1xf32>
    %122 = arith.divf %120, %121 : vector<1x12x1xf32>
    %123 = vector.broadcast %122 : vector<1x12x1xf32> to vector<2x12x10xf32>
    %124 = arith.subf %118, %123 : vector<2x12x10xf32>
    %125 = arith.mulf %124, %124 : vector<2x12x10xf32>
    %cst_45 = arith.constant dense<0.000000e+00> : vector<12xf32>
    %126 = vector.multi_reduction <add>, %125, %cst_45 [0, 2] : vector<2x12x10xf32> to vector<12xf32>
    %127 = vector.shape_cast %126 : vector<12xf32> to vector<1x12x1xf32>
    %cst_46 = arith.constant 2.000000e+01 : f32
    %128 = vector.broadcast %cst_46 : f32 to vector<1x12x1xf32>
    %129 = arith.divf %127, %128 : vector<1x12x1xf32>
    %130 = vector.broadcast %122 : vector<1x12x1xf32> to vector<2x12x10xf32>
    %131 = arith.subf %118, %130 : vector<2x12x10xf32>
    %cst_47 = arith.constant 9.99999974E-6 : f32
    %132 = vector.broadcast %cst_47 : f32 to vector<1x12x1xf32>
    %133 = arith.addf %129, %132 : vector<1x12x1xf32>
    %134 = math.rsqrt %133 : vector<1x12x1xf32>
    %135 = vector.broadcast %134 : vector<1x12x1xf32> to vector<2x12x10xf32>
    %136 = arith.mulf %131, %135 : vector<2x12x10xf32>
    %137 = vector.broadcast %25 : vector<1x12x10xf32> to vector<2x12x10xf32>
    %138 = arith.mulf %136, %137 : vector<2x12x10xf32>
    %139 = vector.broadcast %29 : vector<1x12x10xf32> to vector<2x12x10xf32>
    %140 = arith.addf %138, %139 : vector<2x12x10xf32>
    %141 = vector.shape_cast %140 : vector<2x12x10xf32> to vector<24x10xf32>
    %cst_48 = arith.constant dense<0.000000e+00> : vector<24x50xf32>
    %142 = tpu.matmul %141, %33, %cst_48 {dimension_numbers = #tpu.dot_dimension_numbers<[1], [0], [0], [1], [0, 0, 1, 1], [], []>} : vector<24x10xf32>, vector<10x50xf32>, vector<24x50xf32> -> vector<24x50xf32>
    %143 = vector.broadcast %15 : vector<1x50xf32> to vector<24x50xf32>
    %144 = arith.addf %142, %143 : vector<24x50xf32>
    %cst_49 = arith.constant 0.000000e+00 : f32
    %145 = vector.broadcast %cst_49 : f32 to vector<24x50xf32>
    %146 = arith.maximumf %144, %145 : vector<24x50xf32>
    %147 = vector.shape_cast %146 : vector<24x50xf32> to vector<2x12x50xf32>
    %148 = vector.broadcast %17 : vector<1x1x50xf32> to vector<2x12x50xf32>
    %149 = arith.mulf %147, %148 : vector<2x12x50xf32>
    %cst_50 = arith.constant dense<0.000000e+00> : vector<2x12xf32>
    %150 = vector.multi_reduction <add>, %149, %cst_50 [2] : vector<2x12x50xf32> to vector<2x12xf32>
    %151 = vector.broadcast %18 : vector<1x1xf32> to vector<2x12xf32>
    %152 = arith.addf %150, %151 : vector<2x12xf32>
    %cst_51 = arith.constant dense<0.000000e+00> : vector<2x50xf32>
    %153 = tpu.matmul %152, %34, %cst_51 {dimension_numbers = #tpu.dot_dimension_numbers<[1], [0], [0], [1], [0, 0, 1, 1], [], []>} : vector<2x12xf32>, vector<12x50xf32>, vector<2x50xf32> -> vector<2x50xf32>
    %154 = vector.broadcast %19 : vector<1x50xf32> to vector<2x50xf32>
    %155 = arith.addf %153, %154 : vector<2x50xf32>
    %cst_52 = arith.constant 0.000000e+00 : f32
    %156 = vector.broadcast %cst_52 : f32 to vector<2x50xf32>
    %157 = arith.maximumf %155, %156 : vector<2x50xf32>
    "tpu.trace_start"() <{level = 10 : i32, message = "oj,bj->ob"}> : () -> ()
    %cst_53 = arith.constant dense<0.000000e+00> : vector<1x2xf32>
    %158 = tpu.matmul %20, %157, %cst_53 {dimension_numbers = #tpu.dot_dimension_numbers<[1], [1], [0], [0], [0, 0, 1, 0], [], []>} : vector<1x50xf32>, vector<2x50xf32>, vector<1x2xf32> -> vector<1x2xf32>
    "tpu.trace_stop"() : () -> ()
    %159 = vector.broadcast %21 : vector<1x1xf32> to vector<1x2xf32>
    %160 = arith.addf %158, %159 : vector<1x2xf32>
    %c0_54 = arith.constant 0 : index
    %c0_55 = arith.constant 0 : index
    %161 = vector.load %arg3[%c0_54, %c0_55] : memref<1x2xf32, #tpu.memory_space<vmem>>, vector<1x2xf32>
    tpu.vector_store %arg3[%c0_54, %c0_55], %160 {strides = array<i32>} : memref<1x2xf32, #tpu.memory_space<vmem>>, vector<1x2xf32>,
    return
  }
}

</mosaic_0001>

<llo_original>
// kernel: tpu_custom_call.1
$region0: #{tpu_custom_call.1}
  #allocation0 [shape = 'u32[]', space=smem, size = 0x4, offset = 0x4, fixed_abs, tag = 'smem constant byte address 0x4 - core index']
  #allocation1 [shape = 'u32[144,128]{1,0:T(1,128)}', space=vmem, size = 0x12000, scoped, tag = 'internal scratch']
  %s0 = inlined_call_operand.hbm [shape: f32[2,12], index: 0, kind: input, shape index: {}]
  %s1 = inlined_call_operand.hbm [shape: f32[16,128], index: 1, kind: input, shape index: {}]
  %s2 = inlined_call_operand.hbm [shape: f32[208,128], index: 2, kind: input, shape index: {}]
  %s3 = inlined_call_operand.hbm [shape: f32[1,2], index: 3, kind: output, shape index: {}]
  %s4 = sld [smem:[#allocation0]]
  $region34: #{tpu_custom_call.1} parent=0
    _
  %s6 = ssub.s32 1, %s4
  %s7 = scalar_select 0, %s6, %s4
  $region1: #{tpu_custom_call.1} parent=0
    #allocation2 [shape = 'u8[1024]{0}', space=vmem, size = 0x400, scoped, tag = 'input window, operand 0, single buffered']
    #allocation3 [shape = 's32[1]{0}', space=sflag, size = 0x4, scoped, tag = 'scoped memory for tpu_custom_call.1']
    #allocation4 [shape = 's32[1]{0}', space=sflag, size = 0x4, scoped, tag = 'scoped memory for tpu_custom_call.1']
    #allocation5 [shape = 'u8[8192]{0}', space=vmem, size = 0x2000, scoped, tag = 'input window, operand 1, single buffered']
    #allocation6 [shape = 's32[1]{0}', space=sflag, size = 0x4, scoped, tag = 'scoped memory for tpu_custom_call.1']
    #allocation7 [shape = 'u8[106496]{0}', space=vmem, size = 0x1a000, scoped, tag = 'input window, operand 2, single buffered']
    #allocation8 [shape = 'u8[512]{0}', space=vmem, size = 0x400, scoped, tag = 'output window, operand 0, single buffered']
    %8 = vsyncpa [#allocation3], 0
    %9 = vsyncpa [#allocation6], 0
    %10 = vsyncpa [#allocation4], 0
    // Predicated region
    $region2: #{tpu_custom_call.1} parent=1 // pred_check
      _
    $region3: #{tpu_custom_call.1} parent=1 // pred_check_branch
      %12 = sbr.rel (0) target = $region5
    $region4: #{tpu_custom_call.1} parent=1 // pred_region
      %s14 = ssub.s32 32, 32
      %15 = vsyncadd [#allocation3], %s14
      %s17 = sshll.u32 [#allocation2], 4
      %s18 = int_to_ptr.vmem [resolvable:$true] %s17
      %20 = dma.hbm_to_vmem [thread:$0]  %s0, 32, %s18, [#allocation3]
    $region5: #{tpu_custom_call.1} parent=1 // pred_fallthru
      _
    // Predicated region
    $region6: #{tpu_custom_call.1} parent=1 // pred_check
      _
    $region7: #{tpu_custom_call.1} parent=1 // pred_check_branch
      %22 = sbr.rel (0) target = $region9
    $region8: #{tpu_custom_call.1} parent=1 // pred_region
      %s24 = ssub.s32 256, 256
      %25 = vsyncadd [#allocation6], %s24
      %s26 = sshll.u32 [#allocation5], 4
      %s27 = int_to_ptr.vmem [resolvable:$true] %s26
      %32 = dma.hbm_to_vmem [thread:$0]  %s1, 256, %s27, [#allocation6], 128, 128, 8
    $region9: #{tpu_custom_call.1} parent=1 // pred_fallthru
      _
    // Predicated region
    $region10: #{tpu_custom_call.1} parent=1 // pred_check
      _
    $region11: #{tpu_custom_call.1} parent=1 // pred_check_branch
      %34 = sbr.rel (0) target = $region13
    $region12: #{tpu_custom_call.1} parent=1 // pred_region
      %s36 = ssub.s32 3328, 3328
      %37 = vsyncadd [#allocation6], %s36
      %s38 = sshll.u32 [#allocation7], 4
      %s39 = int_to_ptr.vmem [resolvable:$true] %s38
      %44 = dma.hbm_to_vmem [thread:$0]  %s2, 3328, %s39, [#allocation6], 128, 128, 8
    $region13: #{tpu_custom_call.1} parent=1 // pred_fallthru
      _
    // Predicated region
    $region14: #{tpu_custom_call.1} parent=1 // pred_check
      _
    $region15: #{tpu_custom_call.1} parent=1 // pred_check_branch
      %46 = sbr.rel (0) target = $region17
    $region16: #{tpu_custom_call.1} parent=1 // pred_region
      %47 = dma.done [#allocation3], 32
    $region17: #{tpu_custom_call.1} parent=1 // pred_fallthru
      _
    // Predicated region
    $region18: #{tpu_custom_call.1} parent=1 // pred_check
      _
    $region19: #{tpu_custom_call.1} parent=1 // pred_check_branch
      %49 = sbr.rel (0) target = $region21
    $region20: #{tpu_custom_call.1} parent=1 // pred_region
      %50 = dma.done [#allocation6], 256
    $region21: #{tpu_custom_call.1} parent=1 // pred_fallthru
      _
    // Predicated region
    $region22: #{tpu_custom_call.1} parent=1 // pred_check
      _
    $region23: #{tpu_custom_call.1} parent=1 // pred_check_branch
      %52 = sbr.rel (0) target = $region25
    $region24: #{tpu_custom_call.1} parent=1 // pred_region
      %53 = dma.done [#allocation6], 3328
    $region25: #{tpu_custom_call.1} parent=1 // pred_fallthru
      _
    %v54 = vld [vmem:[#allocation5] sm:$0x1]
    %v55 = vld [vmem:[#allocation5 + $0x1] sm:$0x1]
    %v56 = vld [vmem:[#allocation5 + $0x2] sm:$0x1]
    %v57 = vld [vmem:[#allocation5 + $0x3] sm:$0x1]
    %v58 = vld [vmem:[#allocation5 + $0x4] sm:$0x1]
    %v59 = vld [vmem:[#allocation5 + $0x5] sm:$0x1]
    %v60 = vld [vmem:[#allocation5 + $0x6] sm:$0x1]
    %v61 = vld [vmem:[#allocation5 + $0x7] sm:$0x1]
    %v62 = vld [vmem:[#allocation5 + $0x8] sm:$0x1]
    %v63 = vld [vmem:[#allocation5 + $0x9] sm:$0x1]
    %v64 = vld [vmem:[#allocation5 + $0xa] sm:$0x1]
    %v65 = vld [vmem:[#allocation5 + $0xb] sm:$0x1]
    %v66 = vld [vmem:[#allocation5 + $0xc] sm:$0x1]
    %v67 = vld [vmem:[#allocation5 + $0xd] sm:$0x1]
    %v68 = vld [vmem:[#allocation5 + $0xe] sm:$0x1]
    %v69 = vlaneseq
    %v70 = vshrl.u32 %v69, 7
    %v71 = vsub.s32 0, %v70
    %v72 = vrot.slane %v68, %v71
    %74 = vbcast.lane.b32.xlu0 %v72, 256
    %v75 = vpop.permute.xlu0 %74
    %s77 = sor.u32 256, 8
    %78 = vbcast.lane.b32.xlu0 %v72, %s77
    %v79 = vpop.permute.xlu0 %78
    %v80 = vld [vmem:[#allocation5 + $0xf] sm:$0x1]
    %v81 = vlaneseq
    %v82 = vshrl.u32 %v81, 7
    %v83 = vsub.s32 0, %v82
    %v84 = vrot.slane %v80, %v83
    %86 = vbcast.lane.b32.xlu0 %v84, 256
    %v87 = vpop.permute.xlu0 %86
    %s89 = sor.u32 256, 8
    %90 = vbcast.lane.b32.xlu0 %v84, %s89
    %v91 = vpop.permute.xlu0 %90
    %v92 = vld [vmem:[#allocation7] sm:$0xff]
    %v93 = vld [vmem:[#allocation7 + $0x8] sm:$0x3]
    %v94 = vld [vmem:[#allocation7 + $0x10] sm:$0xff]
    %v95 = vld [vmem:[#allocation7 + $0x18] sm:$0xff]
    %v96 = vld [vmem:[#allocation7 + $0x20] sm:$0xff]
    %v97 = vld [vmem:[#allocation7 + $0x28] sm:$0xff]
    %v98 = vld [vmem:[#allocation7 + $0x30] sm:$0xff]
    %v99 = vld [vmem:[#allocation7 + $0x38] sm:$0xff]
    %v100 = vld [vmem:[#allocation7 + $0x40] sm:$0xff]
    %v101 = vld [vmem:[#allocation7 + $0x48] sm:$0xff]
    %v102 = vld [vmem:[#allocation7 + $0x50] sm:$0xff]
    %v103 = vld [vmem:[#allocation7 + $0x58] sm:$0xff]
    %v104 = vld [vmem:[#allocation7 + $0x60] sm:$0xff]
    %v105 = vld [vmem:[#allocation7 + $0x68] sm:$0xff]
    %v106 = vld [vmem:[#allocation7 + $0x70] sm:$0xf]
    %v107 = vld [vmem:[#allocation7 + $0x78] sm:$0xff]
    %v108 = vld [vmem:[#allocation7 + $0x80] sm:$0xff]
    %v109 = vld [vmem:[#allocation7 + $0x88] sm:$0xff]
    %v110 = vld [vmem:[#allocation7 + $0x90] sm:$0xff]
    %v111 = vld [vmem:[#allocation7 + $0x98] sm:$0xff]
    %v112 = vld [vmem:[#allocation7 + $0xa0] sm:$0xff]
    %v113 = vld [vmem:[#allocation7 + $0xa8] sm:$0x3]
    %v114 = vld [vmem:[#allocation7 + $0xb0] sm:$0xff]
    %v115 = vld [vmem:[#allocation7 + $0xb8] sm:$0x3]
    %v116 = vld [vmem:[#allocation7 + $0xc0] sm:$0xff]
    %v117 = vld [vmem:[#allocation7 + $0xc8] sm:$0xf]
    %v118 = vld [vmem:[#allocation2] sm:$0x3]
    %v119 = vlaneseq
    %v120 = vshrl.u32 %v119, 7
    %v121 = vsub.s32 0, %v120
    %v122 = vrot.slane %v118, %v121
    %124 = vbcast.lane.b32.xlu0 %v122, 256
    %v125 = vpop.permute.xlu0 %124
    %s127 = sor.u32 256, 8
    %128 = vbcast.lane.b32.xlu0 %v122, %s127
    %v129 = vpop.permute.xlu0 %128
    %v130 = vlaneseq
    %v131 = vshrl.u32 %v130, 7
    %v132 = vsub.s32 1, %v131
    %v133 = vrot.slane %v118, %v132
    %135 = vbcast.lane.b32.xlu0 %v133, 256
    %v136 = vpop.permute.xlu0 %135
    %s138 = sor.u32 256, 8
    %139 = vbcast.lane.b32.xlu0 %v133, %s138
    %v140 = vpop.permute.xlu0 %139
    %v141 = vlaneseq
    %v142 = vshrl.u32 %v141, 7
    %v143 = vsub.s32 0, %v142
    %v144 = vrot.slane %v54, %v143
    %v145 = vmul.f32 %v125, %v144
    %v146 = vmul.f32 %v129, %v144
    %v147 = vmul.f32 %v136, %v144
    %v148 = vmul.f32 %v140, %v144
    %v149 = vlaneseq
    %v150 = vshrl.u32 %v149, 7
    %v151 = vsub.s32 0, %v150
    %v152 = vrot.slane %v55, %v151
    %v153 = vadd.f32 %v145, %v152
    %v154 = vadd.f32 %v146, %v152
    %v155 = vadd.f32 %v147, %v152
    %v156 = vadd.f32 %v148, %v152
    %s158 = vtos %v58
    %v159 = vstv %s158
    %v161 = vmul.f32 %v159, %v118
    %162 = vrot.lane.b32.xlu0 %v58, 127
    %v163 = vpop.permute.xlu0 %162
    %s164 = vtos %v163
    %v165 = vstv %s164
    %v167 = vadd.f32 %v161, %v165
    %v170 = vunpack.c.l.s4 1966171168
    %v171 = vunpack.c.0.s8 %v170
    %v172 = vlaneseq
    %v173 = vshrl.u32 %v172, 7
    %v174 = vsub.s32 %v171, %v173
    %v175 = vrot.slane %v167, %v174
    %v176 = vcombine.high %v175, %v175
    %v178 = vunpack.c.l.s4 1966171168
    %v179 = vunpack.c.0.s8 %v178
    %v180 = vlaneseq
    %v181 = vshrl.u32 %v180, 7
    %v182 = vsub.s32 %v179, %v181
    %v183 = vrot.slane %v175, %v182
    %v185 = vunpack.c.l.s4 1966171168
    %v186 = vunpack.c.0.s8 %v185
    %v187 = vlaneseq
    %v188 = vshrl.u32 %v187, 7
    %v189 = vsub.s32 %v186, %v188
    %v190 = vrot.slane %v176, %v189
    %191 = vrot.lane.b32.xlu0 %v58, 126
    %v192 = vpop.permute.xlu0 %191
    %s193 = vtos %v192
    %v194 = vstv %s193
    %v196 = vmul.f32 %v194, %v118
    %197 = vrot.lane.b32.xlu0 %v58, 125
    %v198 = vpop.permute.xlu0 %197
    %s199 = vtos %v198
    %v200 = vstv %s199
    %v202 = vadd.f32 %v196, %v200
    %v205 = vunpack.c.l.s4 1966171168
    %v206 = vunpack.c.0.s8 %v205
    %v207 = vlaneseq
    %v208 = vshrl.u32 %v207, 7
    %v209 = vsub.s32 %v206, %v208
    %v210 = vrot.slane %v202, %v209
    %v211 = vcombine.high %v210, %v210
    %v213 = vunpack.c.l.s4 1966171168
    %v214 = vunpack.c.0.s8 %v213
    %v215 = vlaneseq
    %v216 = vshrl.u32 %v215, 7
    %v217 = vsub.s32 %v214, %v216
    %v218 = vrot.slane %v210, %v217
    %v220 = vunpack.c.l.s4 1966171168
    %v221 = vunpack.c.0.s8 %v220
    %v222 = vlaneseq
    %v223 = vshrl.u32 %v222, 7
    %v224 = vsub.s32 %v221, %v223
    %v225 = vrot.slane %v211, %v224
    %v226 = vlaneseq
    %v227 = vshrl.u32 %v226, 7
    %v228 = vsub.s32 0, %v227
    %v229 = vrot.slane %v183, %v228
    %v230 = vlaneseq
    %v231 = vshrl.u32 %v230, 7
    %v232 = vsub.s32 0, %v231
    %v233 = vrot.slane %v190, %v232
    %v236 = vmul.f32 %v125, %v229
    %v237 = vmul.f32 %v129, %v229
    %v238 = vmul.f32 %v136, %v233
    %v239 = vmul.f32 %v140, %v233
    %v240 = vlaneseq
    %v241 = vshrl.u32 %v240, 7
    %v242 = vsub.s32 0, %v241
    %v243 = vrot.slane %v218, %v242
    %v244 = vlaneseq
    %v245 = vshrl.u32 %v244, 7
    %v246 = vsub.s32 0, %v245
    %v247 = vrot.slane %v225, %v246
    %v250 = vadd.f32 %v236, %v243
    %v251 = vadd.f32 %v237, %v243
    %v252 = vadd.f32 %v238, %v247
    %v253 = vadd.f32 %v239, %v247
    %vm254 = vcmask 97280
    %v255 = vsel %vm254, %v250, -inf
    %v256 = vsel %vm254, %v252, -inf
    %v257 = vmax.f32 %v255, %v256
    %vm258 = vcmask 93184
    %v259 = vsel %vm258, %v251, -inf
    %v260 = vsel %vm258, %v253, -inf
    %v261 = vmax.f32 %v259, %v260
    %v262 = vsub.f32 %v250, %v257
    %v263 = vsub.f32 %v251, %v261
    %v264 = vsub.f32 %v252, %v257
    %v265 = vsub.f32 %v253, %v261
    %v266 = vmul.f32 %v262, 1.442695
    %v267 = vpow.pop %v266
    %v268 = vmul.f32 %v263, 1.442695
    %v269 = vpow.pop %v268
    %v270 = vmul.f32 %v264, 1.442695
    %v271 = vpow.pop %v270
    %v272 = vmul.f32 %v265, 1.442695
    %v273 = vpow.pop %v272
    %v274 = vsel %vm254, %v267, 0.0
    %v275 = vsel %vm254, %v271, 0.0
    %v276 = vadd.f32 %v274, %v275
    %v277 = vsel %vm258, %v269, 0.0
    %v278 = vsel %vm258, %v273, 0.0
    %v279 = vadd.f32 %v277, %v278
    %v280 = vrcp.pop %v276
    %v281 = vmul.f32 %v267, %v280
    %v282 = vrcp.pop %v279
    %v283 = vmul.f32 %v269, %v282
    %v284 = vmul.f32 %v271, %v280
    %v285 = vmul.f32 %v273, %v282
    %v286 = vsel %vm254, %v281, 0.0
    %287 = vadd.xlane.f32.xlu0 %v286
    %v288 = vpop.xlane.xlu0 %287
    %v289 = vsel %vm258, %v283, 0.0
    %290 = vadd.xlane.f32.xlu0 %v289
    %v291 = vpop.xlane.xlu0 %290
    %v292 = vsel %vm254, %v284, 0.0
    %293 = vadd.xlane.f32.xlu0 %v292
    %v294 = vpop.xlane.xlu0 %293
    %v295 = vsel %vm258, %v285, 0.0
    %296 = vadd.xlane.f32.xlu0 %v295
    %v297 = vpop.xlane.xlu0 %296
    %v300 = vunpack.c.l.s4 1966171168
    %v301 = vunpack.c.0.s8 %v300
    %v302 = vlaneseq
    %v303 = vshrl.u32 %v302, 7
    %v304 = vsub.s32 %v301, %v303
    %v305 = vrot.slane %v118, %v304
    %v306 = vcombine.high %v305, %v305
    %v308 = vunpack.c.l.s4 1966171168
    %v309 = vunpack.c.0.s8 %v308
    %v310 = vlaneseq
    %v311 = vshrl.u32 %v310, 7
    %v312 = vsub.s32 %v309, %v311
    %v313 = vrot.slane %v305, %v312
    %v315 = vunpack.c.l.s4 1966171168
    %v316 = vunpack.c.0.s8 %v315
    %v317 = vlaneseq
    %v318 = vshrl.u32 %v317, 7
    %v319 = vsub.s32 %v316, %v318
    %v320 = vrot.slane %v306, %v319
    %v321 = vlaneseq
    %v322 = vshrl.u32 %v321, 7
    %v323 = vsub.s32 0, %v322
    %v324 = vrot.slane %v313, %v323
    %v325 = vlaneseq
    %v326 = vshrl.u32 %v325, 7
    %v327 = vsub.s32 0, %v326
    %v328 = vrot.slane %v320, %v327
    %v331 = vmul.f32 %v281, %v324
    %v332 = vmul.f32 %v283, %v324
    %v333 = vmul.f32 %v284, %v328
    %v334 = vmul.f32 %v285, %v328
    %v335 = vsel %vm254, %v331, 0.0
    %336 = vadd.xlane.f32.xlu0 %v335
    %v337 = vpop.xlane.xlu0 %336
    %v338 = vsel %vm258, %v332, 0.0
    %339 = vadd.xlane.f32.xlu0 %v338
    %v340 = vpop.xlane.xlu0 %339
    %v341 = vsel %vm254, %v333, 0.0
    %342 = vadd.xlane.f32.xlu0 %v341
    %v343 = vpop.xlane.xlu0 %342
    %v344 = vsel %vm258, %v334, 0.0
    %345 = vadd.xlane.f32.xlu0 %v344
    %v346 = vpop.xlane.xlu0 %345
    %v347 = vlaneseq
    %v348 = vshrl.u32 %v347, 7
    %v349 = vsub.s32 0, %v348
    %v350 = vrot.slane %v56, %v349
    %v351 = vmul.f32 %v337, %v350
    %v352 = vmul.f32 %v340, %v350
    %v353 = vmul.f32 %v343, %v350
    %v354 = vmul.f32 %v346, %v350
    %v355 = vlaneseq
    %v356 = vshrl.u32 %v355, 7
    %v357 = vsub.s32 0, %v356
    %v358 = vrot.slane %v57, %v357
    %v359 = vmul.f32 %v288, %v358
    %v360 = vmul.f32 %v291, %v358
    %v361 = vmul.f32 %v294, %v358
    %v362 = vmul.f32 %v297, %v358
    %v363 = vadd.f32 %v351, %v359
    %v364 = vadd.f32 %v352, %v360
    %v365 = vadd.f32 %v353, %v361
    %v366 = vadd.f32 %v354, %v362
    %v367 = vadd.f32 %v153, %v363
    %v368 = vadd.f32 %v154, %v364
    %v369 = vadd.f32 %v155, %v365
    %v370 = vadd.f32 %v156, %v366
    %vm371 = vcmask 80896
    %v372 = vsel %vm371, %v367, 0.0
    %v373 = vsel %vm371, %v369, 0.0
    %v374 = vadd.f32 %v372, %v373
    %375 = vadd.xlane.f32.xlu0 %v374
    %v376 = vpop.xlane.xlu0 %375
    %vm377 = vcmask 76800
    %v378 = vsel %vm377, %v368, 0.0
    %v379 = vsel %vm377, %v370, 0.0
    %v380 = vadd.f32 %v378, %v379
    %381 = vadd.xlane.f32.xlu0 %v380
    %v382 = vpop.xlane.xlu0 %381
    %v383 = vrcp.pop 20.0
    %v384 = vmul.f32 %v376, %v383
    %v385 = vmul.f32 %v382, %v383
    %v386 = vsub.f32 %v367, %v384
    %v387 = vsub.f32 %v368, %v385
    %v388 = vsub.f32 %v369, %v384
    %v389 = vsub.f32 %v370, %v385
    %v390 = vmul.f32 %v386, %v386
    %v391 = vmul.f32 %v387, %v387
    %v392 = vmul.f32 %v388, %v388
    %v393 = vmul.f32 %v389, %v389
    %v394 = vsel %vm371, %v390, 0.0
    %v395 = vsel %vm371, %v392, 0.0
    %v396 = vadd.f32 %v394, %v395
    %397 = vadd.xlane.f32.xlu0 %v396
    %v398 = vpop.xlane.xlu0 %397
    %v399 = vsel %vm377, %v391, 0.0
    %v400 = vsel %vm377, %v393, 0.0
    %v401 = vadd.f32 %v399, %v400
    %402 = vadd.xlane.f32.xlu0 %v401
    %v403 = vpop.xlane.xlu0 %402
    %v404 = vmul.f32 %v398, %v383
    %v405 = vmul.f32 %v403, %v383
    %v406 = vadd.f32 %v404, 1e-05
    %v407 = vadd.f32 %v405, 1e-05
    %v408 = vrsqrt.pop %v406
    %v409 = vrsqrt.pop %v407
    %v410 = vmul.f32 %v386, %v408
    %v411 = vmul.f32 %v387, %v409
    %v412 = vmul.f32 %v388, %v408
    %v413 = vmul.f32 %v389, %v409
    %v414 = vmul.f32 %v410, %v75
    %v415 = vmul.f32 %v411, %v79
    %v416 = vmul.f32 %v412, %v75
    %v417 = vmul.f32 %v413, %v79
    %v418 = vadd.f32 %v414, %v87
    %v419 = vadd.f32 %v415, %v91
    %v420 = vadd.f32 %v416, %v87
    %v421 = vadd.f32 %v417, %v91
    %v426 = vcombine.high %v418, %v418
    %v427 = vcombine.high %v420, %v420
    %v428 = vlaneseq
    %v429 = vshrl.u32 %v428, 7
    %v430 = vsub.s32 0, %v429
    %v431 = vrot.slane %v59, %v430
    %v432 = vcombine.low %v418, %v426
    %v433 = vcombine.low %v419, %v420
    %v434 = vcombine.low %v427, %v421
    %v435 = vsel %vm371, %v432, 0
    %v437 = vsel %vm371, %v433, 0
    %v439 = vsel %vm371, %v434, 0
    %vm441 = vcmask 1041408
    %v443 = vsel %vm441, %v93, 0
    %445 = vmatprep.subr.mxu0 0.0
    %446 = vmatpush1.msra.mxu0 %v92
    %447 = vmatprep.subr.mxu0 0.0
    %448 = vmatpush1.msra.mxu0 %v443
    %449 = vmatprep.subr.mxu0 0.0
    %450 = vmatpush1.msra.mxu0 0.0
    %451 = vmatprep.subr.mxu0 0.0
    %452 = vmatpush1.msra.mxu0 0.0
    %453 = vmatprep.subr.mxu0 0.0
    %454 = vmatpush1.msra.mxu0 0.0
    %455 = vmatprep.subr.mxu0 0.0
    %456 = vmatpush1.msra.mxu0 0.0
    %457 = vmatprep.subr.mxu0 0.0
    %458 = vmatpush1.msra.mxu0 0.0
    %459 = vmatprep.subr.mxu0 0.0
    %460 = vmatpush1.msra.mxu0 0.0
    %461 = vmatprep.subr.mxu0 0.0
    %462 = vmatpush1.msra.mxu0 0.0
    %463 = vmatprep.subr.mxu0 0.0
    %464 = vmatpush1.msra.mxu0 0.0
    %465 = vmatprep.subr.mxu0 0.0
    %466 = vmatpush1.msra.mxu0 0.0
    %467 = vmatprep.subr.mxu0 0.0
    %468 = vmatpush1.msra.mxu0 0.0
    %469 = vmatprep.subr.mxu0 0.0
    %470 = vmatpush1.msra.mxu0 0.0
    %471 = vmatprep.subr.mxu0 0.0
    %472 = vmatpush1.msra.mxu0 0.0
    %473 = vmatprep.subr.mxu0 0.0
    %474 = vmatpush1.msra.mxu0 0.0
    %475 = vmatprep.subr.mxu0 0.0
    %476 = vmatpush1.msra.mxu0 0.0
    %477 = vmatprep.subr.mxu0 0.0
    %478 = vmatpush1.msra.mxu0 0.0
    %479 = vmatprep.subr.mxu0 0.0
    %480 = vmatpush1.msra.mxu0 0.0
    %481 = vmatprep.subr.mxu0 0.0
    %482 = vmatpush1.msra.mxu0 0.0
    %483 = vmatprep.subr.mxu0 0.0
    %484 = vmatpush1.msra.mxu0 0.0
    %485 = vmatprep.subr.mxu0 0.0
    %486 = vmatpush1.msra.mxu0 0.0
    %487 = vmatprep.subr.mxu0 0.0
    %488 = vmatpush1.msra.mxu0 0.0
    %489 = vmatprep.subr.mxu0 0.0
    %490 = vmatpush1.msra.mxu0 0.0
    %491 = vmatprep.subr.mxu0 0.0
    %492 = vmatpush1.msra.mxu0 0.0
    %493 = vmatprep.subr.mxu0 0.0
    %494 = vmatpush1.msra.mxu0 0.0
    %495 = vmatprep.subr.mxu0 0.0
    %496 = vmatpush1.msra.mxu0 0.0
    %497 = vmatprep.subr.mxu0 0.0
    %498 = vmatpush1.msra.mxu0 0.0
    %499 = vmatprep.subr.mxu0 0.0
    %500 = vmatpush1.msra.mxu0 0.0
    %501 = vmatprep.subr.mxu0 0.0
    %502 = vmatpush1.msra.mxu0 0.0
    %503 = vmatprep.subr.mxu0 0.0
    %504 = vmatpush1.msra.mxu0 0.0
    %505 = vmatprep.subr.mxu0 0.0
    %506 = vmatpush1.msra.mxu0 0.0
    %507 = vmatprep.subr.mxu0 0.0
    %508 = vmatpush1.msra.mxu0 0.0
    %509 = vmatprep.mubr.f32.mxu0 0.0
    %510 = vmatmul.mubr.f32.gmra.mrb[0].mxu0 %v435
    %v511 = vpop.f32.mrb[0].mxu0
    %v512 = vadd.f32 %v431, %v511
    %v513 = vpop.f32.mrb[0].mxu0
    %514 = vmatprep.mubr.f32.mxu0 0.0
    %515 = vmatmul.mubr.f32.gmra.mrb[0].mxu0 %v437
    %v516 = vpop.f32.mrb[0].mxu0
    %v517 = vadd.f32 %v431, %v516
    %v518 = vpop.f32.mrb[0].mxu0
    %519 = vmatprep.mubr.f32.mxu0 0.0
    %520 = vmatmul.mubr.f32.gmra.mrb[0].mxu0 %v439
    %v521 = vpop.f32.mrb[0].mxu0
    %v522 = vadd.f32 %v431, %v521
    %v523 = vpop.f32.mrb[0].mxu0
    %524 = vdwg.mxu0
    %v525 = vmax.f32 %v512, 0.0
    %v526 = vmax.f32 %v517, 0.0
    %v527 = vmax.f32 %v522, 0.0
    %v528 = vlaneseq
    %v529 = vshrl.u32 %v528, 7
    %v530 = vsub.s32 0, %v529
    %v531 = vrot.slane %v60, %v530
    %vm532 = vcmask 818176
    %v534 = vsel %vm532, %v525, 0
    %v537 = vsel %vm532, %v526, 0
    %v540 = vsel %vm532, %v527, 0
    %vm542 = vcmask 1043456
    %v544 = vsel %vm542, %v106, 0
    %546 = vmatprep.subr.mxu0 0.0
    %547 = vmatpush1.msra.mxu0 %v94
    %548 = vmatprep.subr.mxu0 0.0
    %549 = vmatpush1.msra.mxu0 %v95
    %550 = vmatprep.subr.mxu0 0.0
    %551 = vmatpush1.msra.mxu0 %v96
    %552 = vmatprep.subr.mxu0 0.0
    %553 = vmatpush1.msra.mxu0 %v97
    %554 = vmatprep.subr.mxu0 0.0
    %555 = vmatpush1.msra.mxu0 %v98
    %556 = vmatprep.subr.mxu0 0.0
    %557 = vmatpush1.msra.mxu0 %v99
    %558 = vmatprep.subr.mxu0 0.0
    %559 = vmatpush1.msra.mxu0 %v100
    %560 = vmatprep.subr.mxu0 0.0
    %561 = vmatpush1.msra.mxu0 %v101
    %562 = vmatprep.subr.mxu0 0.0
    %563 = vmatpush1.msra.mxu0 %v102
    %564 = vmatprep.subr.mxu0 0.0
    %565 = vmatpush1.msra.mxu0 %v103
    %566 = vmatprep.subr.mxu0 0.0
    %567 = vmatpush1.msra.mxu0 %v104
    %568 = vmatprep.subr.mxu0 0.0
    %569 = vmatpush1.msra.mxu0 %v105
    %570 = vmatprep.subr.mxu0 0.0
    %571 = vmatpush1.msra.mxu0 %v544
    %572 = vmatprep.subr.mxu0 0.0
    %573 = vmatpush1.msra.mxu0 0.0
    %574 = vmatprep.subr.mxu0 0.0
    %575 = vmatpush1.msra.mxu0 0.0
    %576 = vmatprep.subr.mxu0 0.0
    %577 = vmatpush1.msra.mxu0 0.0
    %578 = vmatprep.subr.mxu0 0.0
    %579 = vmatpush1.msra.mxu0 0.0
    %580 = vmatprep.subr.mxu0 0.0
    %581 = vmatpush1.msra.mxu0 0.0
    %582 = vmatprep.subr.mxu0 0.0
    %583 = vmatpush1.msra.mxu0 0.0
    %584 = vmatprep.subr.mxu0 0.0
    %585 = vmatpush1.msra.mxu0 0.0
    %586 = vmatprep.subr.mxu0 0.0
    %587 = vmatpush1.msra.mxu0 0.0
    %588 = vmatprep.subr.mxu0 0.0
    %589 = vmatpush1.msra.mxu0 0.0
    %590 = vmatprep.subr.mxu0 0.0
    %591 = vmatpush1.msra.mxu0 0.0
    %592 = vmatprep.subr.mxu0 0.0
    %593 = vmatpush1.msra.mxu0 0.0
    %594 = vmatprep.subr.mxu0 0.0
    %595 = vmatpush1.msra.mxu0 0.0
    %596 = vmatprep.subr.mxu0 0.0
    %597 = vmatpush1.msra.mxu0 0.0
    %598 = vmatprep.subr.mxu0 0.0
    %599 = vmatpush1.msra.mxu0 0.0
    %600 = vmatprep.subr.mxu0 0.0
    %601 = vmatpush1.msra.mxu0 0.0
    %602 = vmatprep.subr.mxu0 0.0
    %603 = vmatpush1.msra.mxu0 0.0
    %604 = vmatprep.subr.mxu0 0.0
    %605 = vmatpush1.msra.mxu0 0.0
    %606 = vmatprep.subr.mxu0 0.0
    %607 = vmatpush1.msra.mxu0 0.0
    %608 = vmatprep.subr.mxu0 0.0
    %609 = vmatpush1.msra.mxu0 0.0
    %610 = vmatprep.mubr.f32.mxu0 0.0
    %611 = vmatmul.mubr.f32.gmra.mrb[0].mxu0 %v534
    %v612 = vpop.f32.mrb[0].mxu0
    %v613 = vadd.f32 %v531, %v612
    %v614 = vpop.f32.mrb[0].mxu0
    %615 = vmatprep.mubr.f32.mxu0 0.0
    %616 = vmatmul.mubr.f32.gmra.mrb[0].mxu0 %v537
    %v617 = vpop.f32.mrb[0].mxu0
    %v618 = vadd.f32 %v531, %v617
    %v619 = vpop.f32.mrb[0].mxu0
    %620 = vmatprep.mubr.f32.mxu0 0.0
    %621 = vmatmul.mubr.f32.gmra.mrb[0].mxu0 %v540
    %v622 = vpop.f32.mrb[0].mxu0
    %v623 = vadd.f32 %v531, %v622
    %v624 = vpop.f32.mrb[0].mxu0
    %625 = vdwg.mxu0
    %v626 = vmax.f32 %v613, 0.0
    %v627 = vmax.f32 %v618, 0.0
    %v628 = vmax.f32 %v623, 0.0
    %v629 = vlaneseq
    %v630 = vshrl.u32 %v629, 7
    %v631 = vsub.s32 0, %v630
    %v632 = vrot.slane %v61, %v631
    %vm633 = vcmask 408576
    %v635 = vsel %vm633, %v626, 0
    %v638 = vsel %vm633, %v627, 0
    %v641 = vsel %vm633, %v628, 0
    %v644 = vsel %vm441, %v113, 0
    %646 = vmatprep.subr.mxu0 0.0
    %647 = vmatpush1.msra.mxu0 %v107
    %648 = vmatprep.subr.mxu0 0.0
    %649 = vmatpush1.msra.mxu0 %v108
    %650 = vmatprep.subr.mxu0 0.0
    %651 = vmatpush1.msra.mxu0 %v109
    %652 = vmatprep.subr.mxu0 0.0
    %653 = vmatpush1.msra.mxu0 %v110
    %654 = vmatprep.subr.mxu0 0.0
    %655 = vmatpush1.msra.mxu0 %v111
    %656 = vmatprep.subr.mxu0 0.0
    %657 = vmatpush1.msra.mxu0 %v112
    %658 = vmatprep.subr.mxu0 0.0
    %659 = vmatpush1.msra.mxu0 %v644
    %660 = vmatprep.subr.mxu0 0.0
    %661 = vmatpush1.msra.mxu0 0.0
    %662 = vmatprep.subr.mxu0 0.0
    %663 = vmatpush1.msra.mxu0 0.0
    %664 = vmatprep.subr.mxu0 0.0
    %665 = vmatpush1.msra.mxu0 0.0
    %666 = vmatprep.subr.mxu0 0.0
    %667 = vmatpush1.msra.mxu0 0.0
    %668 = vmatprep.subr.mxu0 0.0
    %669 = vmatpush1.msra.mxu0 0.0
    %670 = vmatprep.subr.mxu0 0.0
    %671 = vmatpush1.msra.mxu0 0.0
    %672 = vmatprep.subr.mxu0 0.0
    %673 = vmatpush1.msra.mxu0 0.0
    %674 = vmatprep.subr.mxu0 0.0
    %675 = vmatpush1.msra.mxu0 0.0
    %676 = vmatprep.subr.mxu0 0.0
    %677 = vmatpush1.msra.mxu0 0.0
    %678 = vmatprep.subr.mxu0 0.0
    %679 = vmatpush1.msra.mxu0 0.0
    %680 = vmatprep.subr.mxu0 0.0
    %681 = vmatpush1.msra.mxu0 0.0
    %682 = vmatprep.subr.mxu0 0.0
    %683 = vmatpush1.msra.mxu0 0.0
    %684 = vmatprep.subr.mxu0 0.0
    %685 = vmatpush1.msra.mxu0 0.0
    %686 = vmatprep.subr.mxu0 0.0
    %687 = vmatpush1.msra.mxu0 0.0
    %688 = vmatprep.subr.mxu0 0.0
    %689 = vmatpush1.msra.mxu0 0.0
    %690 = vmatprep.subr.mxu0 0.0
    %691 = vmatpush1.msra.mxu0 0.0
    %692 = vmatprep.subr.mxu0 0.0
    %693 = vmatpush1.msra.mxu0 0.0
    %694 = vmatprep.subr.mxu0 0.0
    %695 = vmatpush1.msra.mxu0 0.0
    %696 = vmatprep.subr.mxu0 0.0
    %697 = vmatpush1.msra.mxu0 0.0
    %698 = vmatprep.subr.mxu0 0.0
    %699 = vmatpush1.msra.mxu0 0.0
    %700 = vmatprep.subr.mxu0 0.0
    %701 = vmatpush1.msra.mxu0 0.0
    %702 = vmatprep.subr.mxu0 0.0
    %703 = vmatpush1.msra.mxu0 0.0
    %704 = vmatprep.subr.mxu0 0.0
    %705 = vmatpush1.msra.mxu0 0.0
    %706 = vmatprep.subr.mxu0 0.0
    %707 = vmatpush1.msra.mxu0 0.0
    %708 = vmatprep.subr.mxu0 0.0
    %709 = vmatpush1.msra.mxu0 0.0
    %710 = vmatprep.mubr.f32.mxu0 0.0
    %711 = vmatmul.mubr.f32.gmra.mrb[0].mxu0 %v635
    %v712 = vpop.f32.mrb[0].mxu0
    %v713 = vadd.f32 %v632, %v712
    %v714 = vpop.f32.mrb[0].mxu0
    %715 = vmatprep.mubr.f32.mxu0 0.0
    %716 = vmatmul.mubr.f32.gmra.mrb[0].mxu0 %v638
    %v717 = vpop.f32.mrb[0].mxu0
    %v718 = vadd.f32 %v632, %v717
    %v719 = vpop.f32.mrb[0].mxu0
    %720 = vmatprep.mubr.f32.mxu0 0.0
    %721 = vmatmul.mubr.f32.gmra.mrb[0].mxu0 %v641
    %v722 = vpop.f32.mrb[0].mxu0
    %v723 = vadd.f32 %v632, %v722
    %v724 = vpop.f32.mrb[0].mxu0
    %725 = vdwg.mxu0
    %v729 = vcombine.high %v713, %v713
    %v730 = vcombine.high %v718, %v718
    %v731 = vcombine.high %v723, %v723
    %v733 = vcombine.low %v713, %v729
    %v734 = vcombine.low %v730, %v723
    %v737 = vadd.f32 %v418, %v733
    %v738 = vadd.f32 %v419, %v718
    %v739 = vadd.f32 %v420, %v734
    %v740 = vadd.f32 %v421, %v731
    %v741 = vsel %vm371, %v737, 0.0
    %v742 = vsel %vm371, %v739, 0.0
    %v743 = vadd.f32 %v741, %v742
    %744 = vadd.xlane.f32.xlu0 %v743
    %v745 = vpop.xlane.xlu0 %744
    %v746 = vsel %vm377, %v738, 0.0
    %v747 = vsel %vm377, %v740, 0.0
    %v748 = vadd.f32 %v746, %v747
    %749 = vadd.xlane.f32.xlu0 %v748
    %v750 = vpop.xlane.xlu0 %749
    %v751 = vmul.f32 %v745, %v383
    %v752 = vmul.f32 %v750, %v383
    %v753 = vsub.f32 %v737, %v751
    %v754 = vsub.f32 %v738, %v752
    %v755 = vsub.f32 %v739, %v751
    %v756 = vsub.f32 %v740, %v752
    %v757 = vmul.f32 %v753, %v753
    %v758 = vmul.f32 %v754, %v754
    %v759 = vmul.f32 %v755, %v755
    %v760 = vmul.f32 %v756, %v756
    %v761 = vsel %vm371, %v757, 0.0
    %v762 = vsel %vm371, %v759, 0.0
    %v763 = vadd.f32 %v761, %v762
    %764 = vadd.xlane.f32.xlu0 %v763
    %v765 = vpop.xlane.xlu0 %764
    %v766 = vsel %vm377, %v758, 0.0
    %v767 = vsel %vm377, %v760, 0.0
    %v768 = vadd.f32 %v766, %v767
    %769 = vadd.xlane.f32.xlu0 %v768
    %v770 = vpop.xlane.xlu0 %769
    %v771 = vmul.f32 %v765, %v383
    %v772 = vmul.f32 %v770, %v383
    %v773 = vadd.f32 %v771, 1e-05
    %v774 = vadd.f32 %v772, 1e-05
    %v775 = vrsqrt.pop %v773
    %v776 = vrsqrt.pop %v774
    %v777 = vmul.f32 %v753, %v775
    %v778 = vmul.f32 %v754, %v776
    %v779 = vmul.f32 %v755, %v775
    %v780 = vmul.f32 %v756, %v776
    %v781 = vmul.f32 %v777, %v75
    %v782 = vmul.f32 %v778, %v79
    %v783 = vmul.f32 %v779, %v75
    %v784 = vmul.f32 %v780, %v79
    %v785 = vadd.f32 %v781, %v87
    %v786 = vadd.f32 %v782, %v91
    %v787 = vadd.f32 %v783, %v87
    %v788 = vadd.f32 %v784, %v91
    %v793 = vcombine.high %v785, %v785
    %v794 = vcombine.high %v787, %v787
    %v795 = vlaneseq
    %v796 = vshrl.u32 %v795, 7
    %v797 = vsub.s32 0, %v796
    %v798 = vrot.slane %v62, %v797
    %v799 = vcombine.low %v785, %v793
    %v800 = vcombine.low %v786, %v787
    %v801 = vcombine.low %v794, %v788
    %v802 = vsel %vm371, %v799, 0
    %v804 = vsel %vm371, %v800, 0
    %v806 = vsel %vm371, %v801, 0
    %v809 = vsel %vm441, %v115, 0
    %811 = vmatprep.subr.mxu0 0.0
    %812 = vmatpush1.msra.mxu0 %v114
    %813 = vmatprep.subr.mxu0 0.0
    %814 = vmatpush1.msra.mxu0 %v809
    %815 = vmatprep.subr.mxu0 0.0
    %816 = vmatpush1.msra.mxu0 0.0
    %817 = vmatprep.subr.mxu0 0.0
    %818 = vmatpush1.msra.mxu0 0.0
    %819 = vmatprep.subr.mxu0 0.0
    %820 = vmatpush1.msra.mxu0 0.0
    %821 = vmatprep.subr.mxu0 0.0
    %822 = vmatpush1.msra.mxu0 0.0
    %823 = vmatprep.subr.mxu0 0.0
    %824 = vmatpush1.msra.mxu0 0.0
    %825 = vmatprep.subr.mxu0 0.0
    %826 = vmatpush1.msra.mxu0 0.0
    %827 = vmatprep.subr.mxu0 0.0
    %828 = vmatpush1.msra.mxu0 0.0
    %829 = vmatprep.subr.mxu0 0.0
    %830 = vmatpush1.msra.mxu0 0.0
    %831 = vmatprep.subr.mxu0 0.0
    %832 = vmatpush1.msra.mxu0 0.0
    %833 = vmatprep.subr.mxu0 0.0
    %834 = vmatpush1.msra.mxu0 0.0
    %835 = vmatprep.subr.mxu0 0.0
    %836 = vmatpush1.msra.mxu0 0.0
    %837 = vmatprep.subr.mxu0 0.0
    %838 = vmatpush1.msra.mxu0 0.0
    %839 = vmatprep.subr.mxu0 0.0
    %840 = vmatpush1.msra.mxu0 0.0
    %841 = vmatprep.subr.mxu0 0.0
    %842 = vmatpush1.msra.mxu0 0.0
    %843 = vmatprep.subr.mxu0 0.0
    %844 = vmatpush1.msra.mxu0 0.0
    %845 = vmatprep.subr.mxu0 0.0
    %846 = vmatpush1.msra.mxu0 0.0
    %847 = vmatprep.subr.mxu0 0.0
    %848 = vmatpush1.msra.mxu0 0.0
    %849 = vmatprep.subr.mxu0 0.0
    %850 = vmatpush1.msra.mxu0 0.0
    %851 = vmatprep.subr.mxu0 0.0
    %852 = vmatpush1.msra.mxu0 0.0
    %853 = vmatprep.subr.mxu0 0.0
    %854 = vmatpush1.msra.mxu0 0.0
    %855 = vmatprep.subr.mxu0 0.0
    %856 = vmatpush1.msra.mxu0 0.0
    %857 = vmatprep.subr.mxu0 0.0
    %858 = vmatpush1.msra.mxu0 0.0
    %859 = vmatprep.subr.mxu0 0.0
    %860 = vmatpush1.msra.mxu0 0.0
    %861 = vmatprep.subr.mxu0 0.0
    %862 = vmatpush1.msra.mxu0 0.0
    %863 = vmatprep.subr.mxu0 0.0
    %864 = vmatpush1.msra.mxu0 0.0
    %865 = vmatprep.subr.mxu0 0.0
    %866 = vmatpush1.msra.mxu0 0.0
    %867 = vmatprep.subr.mxu0 0.0
    %868 = vmatpush1.msra.mxu0 0.0
    %869 = vmatprep.subr.mxu0 0.0
    %870 = vmatpush1.msra.mxu0 0.0
    %871 = vmatprep.subr.mxu0 0.0
    %872 = vmatpush1.msra.mxu0 0.0
    %873 = vmatprep.subr.mxu0 0.0
    %874 = vmatpush1.msra.mxu0 0.0
    %875 = vmatprep.mubr.f32.mxu0 0.0
    %876 = vmatmul.mubr.f32.gmra.mrb[0].mxu0 %v802
    %v877 = vpop.f32.mrb[0].mxu0
    %v878 = vadd.f32 %v798, %v877
    %v879 = vpop.f32.mrb[0].mxu0
    %880 = vmatprep.mubr.f32.mxu0 0.0
    %881 = vmatmul.mubr.f32.gmra.mrb[0].mxu0 %v804
    %v882 = vpop.f32.mrb[0].mxu0
    %v883 = vadd.f32 %v798, %v882
    %v884 = vpop.f32.mrb[0].mxu0
    %885 = vmatprep.mubr.f32.mxu0 0.0
    %886 = vmatmul.mubr.f32.gmra.mrb[0].mxu0 %v806
    %v887 = vpop.f32.mrb[0].mxu0
    %v888 = vadd.f32 %v798, %v887
    %v889 = vpop.f32.mrb[0].mxu0
    %890 = vdwg.mxu0
    %v891 = vmax.f32 %v878, 0.0
    %v892 = vmax.f32 %v883, 0.0
    %v893 = vmax.f32 %v888, 0.0
    %v897 = vcombine.high %v891, %v891
    %v898 = vcombine.high %v892, %v892
    %v899 = vcombine.high %v893, %v893
    %v903 = vlaneseq
    %v904 = vshrl.u32 %v903, 7
    %v905 = vsub.s32 0, %v904
    %v906 = vrot.slane %v63, %v905
    %v908 = vcombine.high %v906, %v906
    %v910 = vmul.f32 %v891, %v906
    %v911 = vmul.f32 %v897, %v908
    %v912 = vmul.f32 %v892, %v906
    %v913 = vmul.f32 %v898, %v906
    %v914 = vmul.f32 %v893, %v908
    %v915 = vmul.f32 %v899, %v906
    %v920 = vcombine.low %v910, %v911
    %v921 = vcombine.low %v913, %v914
    %v924 = vsel %vm633, %v920, 0.0
    %925 = vadd.xlane.f32.xlu0 %v924
    %v926 = vpop.xlane.xlu0 %925
    %vm927 = vcmask 404480
    %v928 = vsel %vm927, %v912, 0.0
    %929 = vadd.xlane.f32.xlu0 %v928
    %v930 = vpop.xlane.xlu0 %929
    %v931 = vsel %vm633, %v921, 0.0
    %932 = vadd.xlane.f32.xlu0 %v931
    %v933 = vpop.xlane.xlu0 %932
    %v934 = vsel %vm927, %v915, 0.0
    %935 = vadd.xlane.f32.xlu0 %v934
    %v936 = vpop.xlane.xlu0 %935
    %s938 = vtos %v64
    %v939 = vstv %s938
    %v941 = vadd.f32 %v926, %v939
    %v942 = vadd.f32 %v930, %v939
    %v943 = vadd.f32 %v933, %v939
    %v944 = vadd.f32 %v936, %v939
    %v945 = vlaneseq
    %v946 = vshrl.u32 %v945, 7
    %v947 = vsub.s32 0, %v946
    %v948 = vrot.slane %v65, %v947
    %v953 = vlaneseq
    %v954 = vand.u32 %v953, 127
    %v955 = vlaneseq
    %v956 = vshrl.u32 %v955, 7
    %v957 = vsub.s32 %v954, %v956
    %v958 = vrot.slane %v941, %v957
    %v959 = vadd.s32 %v954, 4294967288
    %v960 = vlaneseq
    %v961 = vshrl.u32 %v960, 7
    %v962 = vsub.s32 %v959, %v961
    %v963 = vrot.slane %v942, %v962
    %vm964 = vcmask 130112
    %v965 = vsel %vm964, %v963, %v958
    %v966 = vlaneseq
    %v967 = vshrl.u32 %v966, 7
    %v968 = vsub.s32 %v954, %v967
    %v969 = vrot.slane %v943, %v968
    %v970 = vlaneseq
    %v971 = vshrl.u32 %v970, 7
    %v972 = vsub.s32 %v959, %v971
    %v973 = vrot.slane %v944, %v972
    %v974 = vsel %vm964, %v973, %v969
    %vm975 = vcmask 1041409
    %v976 = vsel %vm975, %v974, %v965
    %v977 = vsel %vm254, %v976, 0
    %v980 = vsel %vm542, %v117, 0
    %982 = vmatprep.subr.mxu0 0.0
    %983 = vmatpush1.msra.mxu0 %v116
    %984 = vmatprep.subr.mxu0 0.0
    %985 = vmatpush1.msra.mxu0 %v980
    %986 = vmatprep.subr.mxu0 0.0
    %987 = vmatpush1.msra.mxu0 0.0
    %988 = vmatprep.subr.mxu0 0.0
    %989 = vmatpush1.msra.mxu0 0.0
    %990 = vmatprep.subr.mxu0 0.0
    %991 = vmatpush1.msra.mxu0 0.0
    %992 = vmatprep.subr.mxu0 0.0
    %993 = vmatpush1.msra.mxu0 0.0
    %994 = vmatprep.subr.mxu0 0.0
    %995 = vmatpush1.msra.mxu0 0.0
    %996 = vmatprep.subr.mxu0 0.0
    %997 = vmatpush1.msra.mxu0 0.0
    %998 = vmatprep.subr.mxu0 0.0
    %999 = vmatpush1.msra.mxu0 0.0
    %1000 = vmatprep.subr.mxu0 0.0
    %1001 = vmatpush1.msra.mxu0 0.0
    %1002 = vmatprep.subr.mxu0 0.0
    %1003 = vmatpush1.msra.mxu0 0.0
    %1004 = vmatprep.subr.mxu0 0.0
    %1005 = vmatpush1.msra.mxu0 0.0
    %1006 = vmatprep.subr.mxu0 0.0
    %1007 = vmatpush1.msra.mxu0 0.0
    %1008 = vmatprep.subr.mxu0 0.0
    %1009 = vmatpush1.msra.mxu0 0.0
    %1010 = vmatprep.subr.mxu0 0.0
    %1011 = vmatpush1.msra.mxu0 0.0
    %1012 = vmatprep.subr.mxu0 0.0
    %1013 = vmatpush1.msra.mxu0 0.0
    %1014 = vmatprep.subr.mxu0 0.0
    %1015 = vmatpush1.msra.mxu0 0.0
    %1016 = vmatprep.subr.mxu0 0.0
    %1017 = vmatpush1.msra.mxu0 0.0
    %1018 = vmatprep.subr.mxu0 0.0
    %1019 = vmatpush1.msra.mxu0 0.0
    %1020 = vmatprep.subr.mxu0 0.0
    %1021 = vmatpush1.msra.mxu0 0.0
    %1022 = vmatprep.subr.mxu0 0.0
    %1023 = vmatpush1.msra.mxu0 0.0
    %1024 = vmatprep.subr.mxu0 0.0
    %1025 = vmatpush1.msra.mxu0 0.0
    %1026 = vmatprep.subr.mxu0 0.0
    %1027 = vmatpush1.msra.mxu0 0.0
    %1028 = vmatprep.subr.mxu0 0.0
    %1029 = vmatpush1.msra.mxu0 0.0
    %1030 = vmatprep.subr.mxu0 0.0
    %1031 = vmatpush1.msra.mxu0 0.0
    %1032 = vmatprep.subr.mxu0 0.0
    %1033 = vmatpush1.msra.mxu0 0.0
    %1034 = vmatprep.subr.mxu0 0.0
    %1035 = vmatpush1.msra.mxu0 0.0
    %1036 = vmatprep.subr.mxu0 0.0
    %1037 = vmatpush1.msra.mxu0 0.0
    %1038 = vmatprep.subr.mxu0 0.0
    %1039 = vmatpush1.msra.mxu0 0.0
    %1040 = vmatprep.subr.mxu0 0.0
    %1041 = vmatpush1.msra.mxu0 0.0
    %1042 = vmatprep.subr.mxu0 0.0
    %1043 = vmatpush1.msra.mxu0 0.0
    %1044 = vmatprep.subr.mxu0 0.0
    %1045 = vmatpush1.msra.mxu0 0.0
    %1046 = vmatprep.mubr.f32.mxu0 0.0
    %1047 = vmatmul.mubr.f32.gmra.mrb[0].mxu0 %v977
    %v1048 = vpop.f32.mrb[0].mxu0
    %v1049 = vadd.f32 %v948, %v1048
    %v1050 = vpop.f32.mrb[0].mxu0
    %1051 = vdwg.mxu0
    %v1052 = vmax.f32 %v1049, 0.0
    %1054 = vset.pattern.permute.xlu0 0
    %1055 = vperm.xlu0 %1054, %v67
    %v1056 = vpop.permute.xlu0 %1055
    %v1059 = vsel %vm633, %v66, 0
    %v1062 = vsel %vm633, %v1052, 0
    %1064 = vmatprep.subr.mxu0 0.0
    %1065 = vmatpush1.xpose.msra.mxu0 %v1062
    %1066 = vmatprep.subr.mxu0 0.0
    %1067 = vmatpush1.xpose.msra.mxu0 0.0
    %1068 = vmatprep.subr.mxu0 0.0
    %1069 = vmatpush1.xpose.msra.mxu0 0.0
    %1070 = vmatprep.subr.mxu0 0.0
    %1071 = vmatpush1.xpose.msra.mxu0 0.0
    %1072 = vmatprep.subr.mxu0 0.0
    %1073 = vmatpush1.xpose.msra.mxu0 0.0
    %1074 = vmatprep.subr.mxu0 0.0
    %1075 = vmatpush1.xpose.msra.mxu0 0.0
    %1076 = vmatprep.subr.mxu0 0.0
    %1077 = vmatpush1.xpose.msra.mxu0 0.0
    %1078 = vmatprep.subr.mxu0 0.0
    %1079 = vmatpush1.xpose.msra.mxu0 0.0
    %1080 = vmatprep.subr.mxu0 0.0
    %1081 = vmatpush1.xpose.msra.mxu0 0.0
    %1082 = vmatprep.subr.mxu0 0.0
    %1083 = vmatpush1.xpose.msra.mxu0 0.0
    %1084 = vmatprep.subr.mxu0 0.0
    %1085 = vmatpush1.xpose.msra.mxu0 0.0
    %1086 = vmatprep.subr.mxu0 0.0
    %1087 = vmatpush1.xpose.msra.mxu0 0.0
    %1088 = vmatprep.subr.mxu0 0.0
    %1089 = vmatpush1.xpose.msra.mxu0 0.0
    %1090 = vmatprep.subr.mxu0 0.0
    %1091 = vmatpush1.xpose.msra.mxu0 0.0
    %1092 = vmatprep.subr.mxu0 0.0
    %1093 = vmatpush1.xpose.msra.mxu0 0.0
    %1094 = vmatprep.subr.mxu0 0.0
    %1095 = vmatpush1.xpose.msra.mxu0 0.0
    %1096 = vmatprep.subr.mxu0 0.0
    %1097 = vmatpush1.xpose.msra.mxu0 0.0
    %1098 = vmatprep.subr.mxu0 0.0
    %1099 = vmatpush1.xpose.msra.mxu0 0.0
    %1100 = vmatprep.subr.mxu0 0.0
    %1101 = vmatpush1.xpose.msra.mxu0 0.0
    %1102 = vmatprep.subr.mxu0 0.0
    %1103 = vmatpush1.xpose.msra.mxu0 0.0
    %1104 = vmatprep.subr.mxu0 0.0
    %1105 = vmatpush1.xpose.msra.mxu0 0.0
    %1106 = vmatprep.subr.mxu0 0.0
    %1107 = vmatpush1.xpose.msra.mxu0 0.0
    %1108 = vmatprep.subr.mxu0 0.0
    %1109 = vmatpush1.xpose.msra.mxu0 0.0
    %1110 = vmatprep.subr.mxu0 0.0
    %1111 = vmatpush1.xpose.msra.mxu0 0.0
    %1112 = vmatprep.subr.mxu0 0.0
    %1113 = vmatpush1.xpose.msra.mxu0 0.0
    %1114 = vmatprep.subr.mxu0 0.0
    %1115 = vmatpush1.xpose.msra.mxu0 0.0
    %1116 = vmatprep.subr.mxu0 0.0
    %1117 = vmatpush1.xpose.msra.mxu0 0.0
    %1118 = vmatprep.subr.mxu0 0.0
    %1119 = vmatpush1.xpose.msra.mxu0 0.0
    %1120 = vmatprep.subr.mxu0 0.0
    %1121 = vmatpush1.xpose.msra.mxu0 0.0
    %1122 = vmatprep.subr.mxu0 0.0
    %1123 = vmatpush1.xpose.msra.mxu0 0.0
    %1124 = vmatprep.subr.mxu0 0.0
    %1125 = vmatpush1.xpose.msra.mxu0 0.0
    %1126 = vmatprep.subr.mxu0 0.0
    %1127 = vmatpush1.xpose.msra.mxu0 0.0
    %1128 = vmatprep.mubr.f32.mxu0 0.0
    %1129 = vmatmul.mubr.f32.gmra.mrb[0].mxu0 %v1059
    %v1130 = vpop.f32.mrb[0].mxu0
    %v1131 = vadd.f32 %v1056, %v1130
    %v1132 = vpop.f32.mrb[0].mxu0
    %1133 = vdwg.mxu0
    %vm1134 = vcmask 8192
    %1135 = vst.msk [vmem:[#allocation8] sm:$0x1] %vm1134, %v1131
    // Predicated region
    $region26: #{tpu_custom_call.1} parent=1 // pred_check
      _
    $region27: #{tpu_custom_call.1} parent=1 // pred_check_branch
      %1137 = sbr.rel (0) target = $region29
    $region28: #{tpu_custom_call.1} parent=1 // pred_region
      %s1139 = ssub.s32 16, 16
      %1140 = vsyncadd [#allocation4], %s1139
      %s1142 = sshll.u32 [#allocation8], 4
      %s1143 = int_to_ptr.vmem [resolvable:$true] %s1142
      %1145 = dma.vmem_to_hbm [thread:$0]  %s1143, 16, %s3, [#allocation4]
    $region29: #{tpu_custom_call.1} parent=1 // pred_fallthru
      _
    // Predicated region
    $region30: #{tpu_custom_call.1} parent=1 // pred_check
      _
    $region31: #{tpu_custom_call.1} parent=1 // pred_check_branch
      %1147 = sbr.rel (0) target = $region33
    $region32: #{tpu_custom_call.1} parent=1 // pred_region
      %1148 = dma.done [#allocation4], 16
    $region33: #{tpu_custom_call.1} parent=1 // pred_fallthru
      _
    %1149 = vsyncpa [#allocation3], 1
    %1150 = vsyncpa [#allocation6], 1
    %1151 = vsyncpa [#allocation4], 1

</llo_original>
